<compile_context>
chip_gen: v7x
topology: tpu7x:2x2x1
jax: 0.10.0
libtpu: 0.0.40
codegen_flags: <defaults>
</compile_context>

<pallas_src>
import jax
import jax.numpy as jnp
from jax.experimental import pallas as pl
from jax.experimental.pallas import tpu as pltpu


def _round_up(x, m):
    return ((x + m - 1) // m) * m


def _vmem_limit_bytes_default():
    """Per-generation VMEM limit: ~3/4 of physical VMEM, capped at 96 MiB.

    v5e/v6e (128 MiB) -> 96 MiB ; v7x (64 MiB) -> 48 MiB ; unknown -> 48 MiB.
    """
    cap = None
    try:
        info = pltpu.get_tpu_info()
        for name in ("vmem_capacity_bytes", "vmem_size_bytes", "vmem_bytes"):
            v = getattr(info, name, None)
            if v:
                cap = int(v)
                break
    except Exception:
        cap = None
    if not cap:
        cap = 64 * 1024 * 1024        # conservative fallback: v7x per-core VMEM
    return min((cap * 3) // 4, 96 * 1024 * 1024)


# ---------------------------------------------------------------------------
# Kernels. A tile is (tm, tk); B tile is (tk, tn): out_w is transposed once on
# the host, so the contraction is the MXU-native [m,k] @ [k,n] form.
# ---------------------------------------------------------------------------

def _kernel_single_k(a_ref, b_ref, o_ref):
    """K fits one tile: matmul + tanh + relu, no accumulator needed."""
    s = jnp.dot(a_ref[...], b_ref[...], preferred_element_type=jnp.float32)
    o_ref[...] = jnp.maximum(jnp.tanh(s), 0.0).astype(o_ref.dtype)


def _kernel_multi_k_out_acc(a_ref, b_ref, o_ref):
    """Multi-K, f32 output: accumulate directly into the K-resident output
    block (no separate scratch, no epilogue VMEM copy)."""
    k = pl.program_id(2)

    @pl.when(k == 0)
    def _():
        o_ref[...] = jnp.zeros_like(o_ref)

    o_ref[...] += jnp.dot(a_ref[...], b_ref[...],
                          preferred_element_type=jnp.float32)

    @pl.when(k == pl.num_programs(2) - 1)
    def _():
        # TODO(synk): the tanh/relu epilogue could be deferred one (i, j) tile
        # and overlapped with the next tile's matmul to hide EUP time.
        o_ref[...] = jnp.maximum(jnp.tanh(o_ref[...]), 0.0)


def _kernel_multi_k_scratch(a_ref, b_ref, o_ref, acc_ref):
    """Multi-K, narrow (non-f32) output: f32 accumulator scratch."""
    k = pl.program_id(2)

    @pl.when(k == 0)
    def _():
        acc_ref[...] = jnp.zeros_like(acc_ref)

    acc_ref[...] += jnp.dot(a_ref[...], b_ref[...],
                            preferred_element_type=jnp.float32)

    @pl.when(k == pl.num_programs(2) - 1)
    def _():
        o_ref[...] = jnp.maximum(jnp.tanh(acc_ref[...]), 0.0).astype(o_ref.dtype)


def rough_filter(in_w, out_w, *, tm=512, tn=1024, tk=512,
                 compute_dtype=jnp.bfloat16, out_dtype=None,
                 vmem_limit_bytes=None):
    """score = relu(tanh(in_w @ out_w.T)) as one fused Pallas TPU kernel.

    compute_dtype: dtype A/B tiles are streamed & multiplied in (default bf16:
        full-rate MXU and half the input DMA; accumulation stays f32). Pass
        jnp.float32 for reference-tight numerics.
    out_dtype: score dtype (default in_w.dtype). bf16 halves the dominant
        M*N output writeback; scores are in [0, 1] so bf16 is ample.
    """
    M, K = in_w.shape
    N, K2 = out_w.shape
    assert K == K2, "embedding dims must match"

    out_dtype = in_w.dtype if out_dtype is None else out_dtype
    compute = jnp.dtype(compute_dtype if compute_dtype is not None else in_w.dtype)
    in_bytes = compute.itemsize
    out_bytes = jnp.dtype(out_dtype).itemsize

    if vmem_limit_bytes is None:
        vmem_limit_bytes = _vmem_limit_bytes_default()
    sizing_budget = int(vmem_limit_bytes * 0.85)   # headroom for Mosaic scratch

    # Sub-32-bit dtypes pack 2 rows per sublane -> second-minor dims want 16.
    sub = 16 if (in_bytes < 4 or out_bytes < 4) else 8
    tm = min(_round_up(tm, sub), _round_up(M, sub))
    tn = min(_round_up(tn, 128), _round_up(N, 128))
    tk = min(_round_up(tk, 128), _round_up(K, 128))

    def vmem_est(tm_, tn_, tk_):
        k_steps_ = _round_up(K, tk_) // tk_
        est = 2 * (tm_ * tk_ * in_bytes + tk_ * tn_ * in_bytes
                   + tm_ * tn_ * out_bytes)
        if k_steps_ > 1 and jnp.dtype(out_dtype) != jnp.float32:
            est += tm_ * tn_ * 4
        return est

    # Shrink tiles only if the working set would not fit the real VMEM budget.
    while vmem_est(tm, tn, tk) > sizing_budget:
        if tk > 128:
            tk = max(128, _round_up(tk // 2, 128))
        elif tn > 128:
            tn = max(128, _round_up(tn // 2, 128))
        elif tm > sub:
            tm = max(sub, _round_up(tm // 2, sub))
        else:
            break

    Mp, Np, Kp = _round_up(M, tm), _round_up(N, tn), _round_up(K, tk)
    k_steps = Kp // tk

    # Host-side prep: one fused XLA pass per operand -- cast to the compute
    # dtype, transpose out_w once to [K, N], and zero-pad remainders (K padding
    # is required for correctness; M/N padding only creates rows/cols that are
    # sliced away below).
    a = in_w.astype(compute)
    if (Mp, Kp) != (M, K):
        a = jnp.pad(a, ((0, Mp - M), (0, Kp - K)))
    b = out_w.astype(compute).T                      # [K, N]
    if (Kp, Np) != (K, N):
        b = jnp.pad(b, ((0, Kp - K), (0, Np - N)))

    cost = pl.CostEstimate(
        flops=2 * M * N * K,
        transcendentals=M * N,
        bytes_accessed=M * K * in_bytes + N * K * in_bytes + M * N * out_bytes,
    )

    if k_steps == 1:
        kernel = _kernel_single_k
        grid = (Mp // tm, Np // tn)
        in_specs = [pl.BlockSpec((tm, tk), lambda i, j: (i, 0)),
                    pl.BlockSpec((tk, tn), lambda i, j: (0, j))]
        out_specs = pl.BlockSpec((tm, tn), lambda i, j: (i, j))
        scratch = ()
        dims = ("parallel", "parallel")
    else:
        grid = (Mp // tm, Np // tn, k_steps)
        in_specs = [pl.BlockSpec((tm, tk), lambda i, j, k: (i, k)),
                    pl.BlockSpec((tk, tn), lambda i, j, k: (k, j))]
        out_specs = pl.BlockSpec((tm, tn), lambda i, j, k: (i, j))
        dims = ("parallel", "parallel", "arbitrary")
        if jnp.dtype(out_dtype) == jnp.float32:
            kernel = _kernel_multi_k_out_acc
            scratch = ()
        else:
            kernel = _kernel_multi_k_scratch
            scratch = (pltpu.VMEM((tm, tn), jnp.float32),)

    out = pl.pallas_call(
        kernel,
        out_shape=jax.ShapeDtypeStruct((Mp, Np), out_dtype),
        grid_spec=pltpu.PrefetchScalarGridSpec(
            num_scalar_prefetch=0,
            grid=grid,
            in_specs=in_specs,
            out_specs=out_specs,
            scratch_shapes=scratch),
        compiler_params=pltpu.CompilerParams(
            dimension_semantics=dims,
            vmem_limit_bytes=int(vmem_limit_bytes)),
        cost_estimate=cost,
    )(a, b)

    if (Mp, Np) != (M, N):
        out = out[:M, :N]
    return out


def rough_filter_ref(in_w, out_w, cast_dtype=None):
    """Pure-JAX reference; optionally reproduces the bf16-input compute path."""
    a, b = in_w, out_w
    if cast_dtype is not None:
        a = a.astype(cast_dtype).astype(jnp.float32)
        b = b.astype(cast_dtype).astype(jnp.float32)
    return jax.nn.relu(jnp.tanh(jnp.dot(a, b.T)))


if __name__ == "__main__":
    # Deterministic synthetic parameters (nn.Embedding default init ~ N(0, 1)).
    user_num = 256
    embedding_size = 128

    key = jax.random.PRNGKey(0)
    k_in, k_out = jax.random.split(key)
    in_user_embedding_weight = jax.random.normal(
        k_in, (user_num, embedding_size), dtype=jnp.float32)
    out_user_embedding_weight = jax.random.normal(
        k_out, (user_num, embedding_size), dtype=jnp.float32)

    # 1) Reference-tight f32 compute path.
    score = jax.block_until_ready(
        rough_filter(in_user_embedding_weight, out_user_embedding_weight,
                     compute_dtype=jnp.float32))
    assert score.shape == (user_num, user_num)
    assert score.dtype == jnp.float32
    expected = rough_filter_ref(in_user_embedding_weight, out_user_embedding_weight)
    assert jnp.allclose(score, expected, atol=1e-4, rtol=1e-4), "mismatch (f32)"

    # 2) Default fast path (bf16 inputs on the MXU, f32 accumulation/output):
    #    compare against the same-precision reference (bf16-cast inputs).
    score_fast = jax.block_until_ready(
        rough_filter(in_user_embedding_weight, out_user_embedding_weight))
    expected_bf = rough_filter_ref(in_user_embedding_weight,
                                   out_user_embedding_weight,
                                   cast_dtype=jnp.bfloat16)
    assert jnp.allclose(score_fast, expected_bf, atol=5e-3, rtol=5e-3), \
        "mismatch (bf16 fast path)"

    # 3) Non-aligned shapes: exercises the padding path.
    k1, k2 = jax.random.split(k_out)
    a2 = jax.random.normal(k1, (100, 72), dtype=jnp.float32)
    b2 = jax.random.normal(k2, (60, 72), dtype=jnp.float32)
    s2 = jax.block_until_ready(rough_filter(a2, b2, compute_dtype=jnp.float32))
    assert s2.shape == (100, 60)
    assert jnp.allclose(s2, rough_filter_ref(a2, b2), atol=1e-4, rtol=1e-4), \
        "mismatch (unaligned)"

    # 4) K larger than one tile: accumulate-into-output multi-K kernel (f32).
    k3, k4 = jax.random.split(k1)
    a3 = jax.random.normal(k3, (64, 640), dtype=jnp.float32)
    b3 = jax.random.normal(k4, (64, 640), dtype=jnp.float32)
    s3 = jax.block_until_ready(rough_filter(a3, b3, compute_dtype=jnp.float32))
    assert s3.shape == (64, 64)
    assert jnp.allclose(s3, rough_filter_ref(a3, b3), atol=1e-4, rtol=1e-4), \
        "mismatch (multi-K f32)"

    # 5) Multi-K with narrow bf16 output: scratch-accumulator kernel.
    s4 = jax.block_until_ready(rough_filter(a3, b3, out_dtype=jnp.bfloat16))
    assert s4.shape == (64, 64) and s4.dtype == jnp.bfloat16
    assert jnp.allclose(s4.astype(jnp.float32),
                        rough_filter_ref(a3, b3, cast_dtype=jnp.bfloat16),
                        atol=1.5e-2, rtol=1.5e-2), "mismatch (bf16 out)"

    print("KERNEL_OK")
</pallas_src>

<mosaic_0001>
module attributes {stable_mosaic.version = 11 : i64} {
  func.func @_kernel_single_k(%arg0: i32, %arg1: i32, %arg2: memref<256x128xf32, #tpu.memory_space<vmem>>, %arg3: memref<128x256xf32, #tpu.memory_space<vmem>>, %arg4: memref<256x256xf32, #tpu.memory_space<vmem>>) attributes {dimension_semantics = [#tpu.dimension_semantics<parallel>, #tpu.dimension_semantics<parallel>], iteration_bounds = array<i64: 1, 1>, scalar_prefetch = 0 : i64, scratch_operands = 0 : i64, tpu.core_type = #tpu.core_type<tc>, window_params = [{transform_indices = @transform_0, window_bounds = array<i64: 256, 128>}, {transform_indices = @transform_1, window_bounds = array<i64: 128, 256>}, {transform_indices = @transform_2, window_bounds = array<i64: 256, 256>}]} {
    %c0 = arith.constant 0 : index
    %c0_0 = arith.constant 0 : index
    %0 = vector.load %arg2[%c0, %c0_0] : memref<256x128xf32, #tpu.memory_space<vmem>>, vector<256x128xf32>
    %c0_1 = arith.constant 0 : index
    %c0_2 = arith.constant 0 : index
    %1 = vector.load %arg3[%c0_1, %c0_2] : memref<128x256xf32, #tpu.memory_space<vmem>>, vector<128x256xf32>
    %cst = arith.constant dense<0.000000e+00> : vector<256x256xf32>
    %2 = tpu.matmul %0, %1, %cst {dimension_numbers = #tpu.dot_dimension_numbers<[1], [0], [0], [1], [0, 0, 1, 1], [], []>} : vector<256x128xf32>, vector<128x256xf32>, vector<256x256xf32> -> vector<256x256xf32>
    %3 = math.tanh %2 : vector<256x256xf32>
    %cst_3 = arith.constant 0.000000e+00 : f32
    %4 = vector.broadcast %cst_3 : f32 to vector<256x256xf32>
    %5 = arith.maximumf %3, %4 : vector<256x256xf32>
    %c0_4 = arith.constant 0 : index
    %c0_5 = arith.constant 0 : index
    %6 = vector.load %arg4[%c0_4, %c0_5] : memref<256x256xf32, #tpu.memory_space<vmem>>, vector<256x256xf32>
    tpu.vector_store %arg4[%c0_4, %c0_5], %5 {strides = array<i32>} : memref<256x256xf32, #tpu.memory_space<vmem>>, vector<256x256xf32>,
    return
  }
  func.func @transform_0(%arg0: i32, %arg1: i32) -> (i32, i32) {
    %c0_i32 = arith.constant 0 : i32
    %c0_i32_0 = arith.constant 0 : i32
    return %arg0, %c0_i32 : i32, i32
  }
  func.func @transform_1(%arg0: i32, %arg1: i32) -> (i32, i32) {
    %c0_i32 = arith.constant 0 : i32
    %c0_i32_0 = arith.constant 0 : i32
    return %c0_i32, %arg1 : i32, i32
  }
  func.func @transform_2(%arg0: i32, %arg1: i32) -> (i32, i32) {
    %c0_i32 = arith.constant 0 : i32
    return %arg0, %arg1 : i32, i32
  }
}

</mosaic_0001>

<llo_original>
// kernel: tpu_custom_call.1
$region0: #{tpu_custom_call.1}
  #allocation0 [shape = 'u32[]', space=smem, size = 0x4, offset = 0x4, fixed_abs, tag = 'smem constant byte address 0x4 - core index']
  #allocation1 [shape = 'u32[144,128]{1,0:T(1,128)}', space=vmem, size = 0x12000, scoped, tag = 'internal scratch']
  %s0 = inlined_call_operand.hbm [shape: f32[256,128], index: 0, kind: input, shape index: {}]
  %s1 = inlined_call_operand.hbm [shape: f32[128,256], index: 1, kind: input, shape index: {}]
  %s2 = inlined_call_operand.hbm [shape: f32[256,256], index: 2, kind: output, shape index: {}]
  %s3 = sld [smem:[#allocation0]]
  $region26: #{tpu_custom_call.1} parent=0
    _
  %s5 = ssub.s32 1, %s3
  %s6 = scalar_select 0, %s5, %s3
  $region1: #{tpu_custom_call.1} parent=0
    #allocation2 [shape = 'u8[131072]{0}', space=vmem, size = 0x20000, scoped, tag = 'input window, operand 0, single buffered']
    #allocation3 [shape = 's32[1]{0}', space=sflag, size = 0x4, scoped, tag = 'scoped memory for tpu_custom_call.1']
    #allocation4 [shape = 's32[1]{0}', space=sflag, size = 0x4, scoped, tag = 'scoped memory for tpu_custom_call.1']
    #allocation5 [shape = 'u8[131072]{0}', space=vmem, size = 0x20000, scoped, tag = 'input window, operand 1, single buffered']
    #allocation6 [shape = 's32[1]{0}', space=sflag, size = 0x4, scoped, tag = 'scoped memory for tpu_custom_call.1']
    #allocation7 [shape = 'u8[262144]{0}', space=vmem, size = 0x40000, scoped, tag = 'output window, operand 0, single buffered']
    %7 = vsyncpa [#allocation3], 0
    %8 = vsyncpa [#allocation6], 0
    %9 = vsyncpa [#allocation4], 0
    // Predicated region
    $region2: #{tpu_custom_call.1} parent=1 // pred_check
      _
    $region3: #{tpu_custom_call.1} parent=1 // pred_check_branch
      %11 = sbr.rel (0) target = $region5
    $region4: #{tpu_custom_call.1} parent=1 // pred_region
      %s13 = ssub.s32 4096, 4096
      %14 = vsyncadd [#allocation3], %s13
      %s15 = sshll.u32 [#allocation2], 4
      %s16 = int_to_ptr.vmem [resolvable:$true] %s15
      %21 = dma.hbm_to_vmem [thread:$0]  %s0, 4096, %s16, [#allocation3], 128, 128, 8
    $region5: #{tpu_custom_call.1} parent=1 // pred_fallthru
      _
    // Predicated region
    $region6: #{tpu_custom_call.1} parent=1 // pred_check
      _
    $region7: #{tpu_custom_call.1} parent=1 // pred_check_branch
      %23 = sbr.rel (0) target = $region9
    $region8: #{tpu_custom_call.1} parent=1 // pred_region
      %s25 = ssub.s32 4096, 4096
      %26 = vsyncadd [#allocation6], %s25
      %s27 = sshll.u32 [#allocation5], 4
      %s28 = int_to_ptr.vmem [resolvable:$true] %s27
      %33 = dma.hbm_to_vmem [thread:$0]  %s1, 4096, %s28, [#allocation6], 256, 256, 16
    $region9: #{tpu_custom_call.1} parent=1 // pred_fallthru
      _
    // Predicated region
    $region10: #{tpu_custom_call.1} parent=1 // pred_check
      _
    $region11: #{tpu_custom_call.1} parent=1 // pred_check_branch
      %35 = sbr.rel (0) target = $region13
    $region12: #{tpu_custom_call.1} parent=1 // pred_region
      %36 = dma.done [#allocation3], 4096
    $region13: #{tpu_custom_call.1} parent=1 // pred_fallthru
      _
    // Predicated region
    $region14: #{tpu_custom_call.1} parent=1 // pred_check
      _
    $region15: #{tpu_custom_call.1} parent=1 // pred_check_branch
      %38 = sbr.rel (0) target = $region17
    $region16: #{tpu_custom_call.1} parent=1 // pred_region
      %39 = dma.done [#allocation6], 4096
    $region17: #{tpu_custom_call.1} parent=1 // pred_fallthru
      _
    %v40 = vld [vmem:[#allocation2] sm:$0xff]
    %v41 = vld [vmem:[#allocation2 + $0x8] sm:$0xff]
    %v42 = vld [vmem:[#allocation2 + $0x10] sm:$0xff]
    %v43 = vld [vmem:[#allocation2 + $0x18] sm:$0xff]
    %v44 = vld [vmem:[#allocation2 + $0x20] sm:$0xff]
    %v45 = vld [vmem:[#allocation2 + $0x28] sm:$0xff]
    %v46 = vld [vmem:[#allocation2 + $0x30] sm:$0xff]
    %v47 = vld [vmem:[#allocation2 + $0x38] sm:$0xff]
    %v48 = vld [vmem:[#allocation2 + $0x40] sm:$0xff]
    %v49 = vld [vmem:[#allocation2 + $0x48] sm:$0xff]
    %v50 = vld [vmem:[#allocation2 + $0x50] sm:$0xff]
    %v51 = vld [vmem:[#allocation2 + $0x58] sm:$0xff]
    %v52 = vld [vmem:[#allocation2 + $0x60] sm:$0xff]
    %v53 = vld [vmem:[#allocation2 + $0x68] sm:$0xff]
    %v54 = vld [vmem:[#allocation2 + $0x70] sm:$0xff]
    %v55 = vld [vmem:[#allocation2 + $0x78] sm:$0xff]
    %v56 = vld [vmem:[#allocation2 + $0x80] sm:$0xff]
    %v57 = vld [vmem:[#allocation2 + $0x88] sm:$0xff]
    %v58 = vld [vmem:[#allocation2 + $0x90] sm:$0xff]
    %v59 = vld [vmem:[#allocation2 + $0x98] sm:$0xff]
    %v60 = vld [vmem:[#allocation2 + $0xa0] sm:$0xff]
    %v61 = vld [vmem:[#allocation2 + $0xa8] sm:$0xff]
    %v62 = vld [vmem:[#allocation2 + $0xb0] sm:$0xff]
    %v63 = vld [vmem:[#allocation2 + $0xb8] sm:$0xff]
    %v64 = vld [vmem:[#allocation2 + $0xc0] sm:$0xff]
    %v65 = vld [vmem:[#allocation2 + $0xc8] sm:$0xff]
    %v66 = vld [vmem:[#allocation2 + $0xd0] sm:$0xff]
    %v67 = vld [vmem:[#allocation2 + $0xd8] sm:$0xff]
    %v68 = vld [vmem:[#allocation2 + $0xe0] sm:$0xff]
    %v69 = vld [vmem:[#allocation2 + $0xe8] sm:$0xff]
    %v70 = vld [vmem:[#allocation2 + $0xf0] sm:$0xff]
    %v71 = vld [vmem:[#allocation2 + $0xf8] sm:$0xff]
    %v72 = vld [vmem:[#allocation5] sm:$0xff]
    %v73 = vld [vmem:[#allocation5 + $0x8] sm:$0xff]
    %v74 = vld [vmem:[#allocation5 + $0x10] sm:$0xff]
    %v75 = vld [vmem:[#allocation5 + $0x18] sm:$0xff]
    %v76 = vld [vmem:[#allocation5 + $0x20] sm:$0xff]
    %v77 = vld [vmem:[#allocation5 + $0x28] sm:$0xff]
    %v78 = vld [vmem:[#allocation5 + $0x30] sm:$0xff]
    %v79 = vld [vmem:[#allocation5 + $0x38] sm:$0xff]
    %v80 = vld [vmem:[#allocation5 + $0x40] sm:$0xff]
    %v81 = vld [vmem:[#allocation5 + $0x48] sm:$0xff]
    %v82 = vld [vmem:[#allocation5 + $0x50] sm:$0xff]
    %v83 = vld [vmem:[#allocation5 + $0x58] sm:$0xff]
    %v84 = vld [vmem:[#allocation5 + $0x60] sm:$0xff]
    %v85 = vld [vmem:[#allocation5 + $0x68] sm:$0xff]
    %v86 = vld [vmem:[#allocation5 + $0x70] sm:$0xff]
    %v87 = vld [vmem:[#allocation5 + $0x78] sm:$0xff]
    %v88 = vld [vmem:[#allocation5 + $0x80] sm:$0xff]
    %v89 = vld [vmem:[#allocation5 + $0x88] sm:$0xff]
    %v90 = vld [vmem:[#allocation5 + $0x90] sm:$0xff]
    %v91 = vld [vmem:[#allocation5 + $0x98] sm:$0xff]
    %v92 = vld [vmem:[#allocation5 + $0xa0] sm:$0xff]
    %v93 = vld [vmem:[#allocation5 + $0xa8] sm:$0xff]
    %v94 = vld [vmem:[#allocation5 + $0xb0] sm:$0xff]
    %v95 = vld [vmem:[#allocation5 + $0xb8] sm:$0xff]
    %v96 = vld [vmem:[#allocation5 + $0xc0] sm:$0xff]
    %v97 = vld [vmem:[#allocation5 + $0xc8] sm:$0xff]
    %v98 = vld [vmem:[#allocation5 + $0xd0] sm:$0xff]
    %v99 = vld [vmem:[#allocation5 + $0xd8] sm:$0xff]
    %v100 = vld [vmem:[#allocation5 + $0xe0] sm:$0xff]
    %v101 = vld [vmem:[#allocation5 + $0xe8] sm:$0xff]
    %v102 = vld [vmem:[#allocation5 + $0xf0] sm:$0xff]
    %v103 = vld [vmem:[#allocation5 + $0xf8] sm:$0xff]
    %104 = vmatprep.subr.mxu0 %v73
    %105 = vmatpush1.msra.mxu0 %v72
    %106 = vmatprep.subr.mxu0 %v75
    %107 = vmatpush1.msra.mxu0 %v74
    %108 = vmatprep.subr.mxu0 %v77
    %109 = vmatpush1.msra.mxu0 %v76
    %110 = vmatprep.subr.mxu0 %v79
    %111 = vmatpush1.msra.mxu0 %v78
    %112 = vmatprep.subr.mxu0 %v81
    %113 = vmatpush1.msra.mxu0 %v80
    %114 = vmatprep.subr.mxu0 %v83
    %115 = vmatpush1.msra.mxu0 %v82
    %116 = vmatprep.subr.mxu0 %v85
    %117 = vmatpush1.msra.mxu0 %v84
    %118 = vmatprep.subr.mxu0 %v87
    %119 = vmatpush1.msra.mxu0 %v86
    %120 = vmatprep.subr.mxu0 %v89
    %121 = vmatpush1.msra.mxu0 %v88
    %122 = vmatprep.subr.mxu0 %v91
    %123 = vmatpush1.msra.mxu0 %v90
    %124 = vmatprep.subr.mxu0 %v93
    %125 = vmatpush1.msra.mxu0 %v92
    %126 = vmatprep.subr.mxu0 %v95
    %127 = vmatpush1.msra.mxu0 %v94
    %128 = vmatprep.subr.mxu0 %v97
    %129 = vmatpush1.msra.mxu0 %v96
    %130 = vmatprep.subr.mxu0 %v99
    %131 = vmatpush1.msra.mxu0 %v98
    %132 = vmatprep.subr.mxu0 %v101
    %133 = vmatpush1.msra.mxu0 %v100
    %134 = vmatprep.subr.mxu0 %v103
    %135 = vmatpush1.msra.mxu0 %v102
    %136 = vmatprep.subr.mxu0 0.0
    %137 = vmatpush1.msra.mxu0 0.0
    %138 = vmatprep.subr.mxu0 0.0
    %139 = vmatpush1.msra.mxu0 0.0
    %140 = vmatprep.subr.mxu0 0.0
    %141 = vmatpush1.msra.mxu0 0.0
    %142 = vmatprep.subr.mxu0 0.0
    %143 = vmatpush1.msra.mxu0 0.0
    %144 = vmatprep.subr.mxu0 0.0
    %145 = vmatpush1.msra.mxu0 0.0
    %146 = vmatprep.subr.mxu0 0.0
    %147 = vmatpush1.msra.mxu0 0.0
    %148 = vmatprep.subr.mxu0 0.0
    %149 = vmatpush1.msra.mxu0 0.0
    %150 = vmatprep.subr.mxu0 0.0
    %151 = vmatpush1.msra.mxu0 0.0
    %152 = vmatprep.subr.mxu0 0.0
    %153 = vmatpush1.msra.mxu0 0.0
    %154 = vmatprep.subr.mxu0 0.0
    %155 = vmatpush1.msra.mxu0 0.0
    %156 = vmatprep.subr.mxu0 0.0
    %157 = vmatpush1.msra.mxu0 0.0
    %158 = vmatprep.subr.mxu0 0.0
    %159 = vmatpush1.msra.mxu0 0.0
    %160 = vmatprep.subr.mxu0 0.0
    %161 = vmatpush1.msra.mxu0 0.0
    %162 = vmatprep.subr.mxu0 0.0
    %163 = vmatpush1.msra.mxu0 0.0
    %164 = vmatprep.subr.mxu0 0.0
    %165 = vmatpush1.msra.mxu0 0.0
    %166 = vmatprep.subr.mxu0 0.0
    %167 = vmatpush1.msra.mxu0 0.0
    %168 = vmatprep.mubr.f32.mxu0 0.0
    %169 = vmatmul.mubr.f32.gmra.mrb[0].mxu0 %v40
    %v170 = vpop.f32.mrb[0].mxu0
    %v171 = vadd.f32 0.0, %v170
    %v172 = vpop.f32.mrb[0].mxu0
    %v173 = vadd.f32 0.0, %v172
    %174 = vmatprep.mubr.f32.mxu0 0.0
    %175 = vmatmul.mubr.f32.gmra.mrb[0].mxu0 %v41
    %v176 = vpop.f32.mrb[0].mxu0
    %v177 = vadd.f32 0.0, %v176
    %v178 = vpop.f32.mrb[0].mxu0
    %v179 = vadd.f32 0.0, %v178
    %180 = vmatprep.mubr.f32.mxu0 0.0
    %181 = vmatmul.mubr.f32.gmra.mrb[0].mxu0 %v42
    %v182 = vpop.f32.mrb[0].mxu0
    %v183 = vadd.f32 0.0, %v182
    %v184 = vpop.f32.mrb[0].mxu0
    %v185 = vadd.f32 0.0, %v184
    %186 = vmatprep.mubr.f32.mxu0 0.0
    %187 = vmatmul.mubr.f32.gmra.mrb[0].mxu0 %v43
    %v188 = vpop.f32.mrb[0].mxu0
    %v189 = vadd.f32 0.0, %v188
    %v190 = vpop.f32.mrb[0].mxu0
    %v191 = vadd.f32 0.0, %v190
    %192 = vmatprep.mubr.f32.mxu0 0.0
    %193 = vmatmul.mubr.f32.gmra.mrb[0].mxu0 %v44
    %v194 = vpop.f32.mrb[0].mxu0
    %v195 = vadd.f32 0.0, %v194
    %v196 = vpop.f32.mrb[0].mxu0
    %v197 = vadd.f32 0.0, %v196
    %198 = vmatprep.mubr.f32.mxu0 0.0
    %199 = vmatmul.mubr.f32.gmra.mrb[0].mxu0 %v45
    %v200 = vpop.f32.mrb[0].mxu0
    %v201 = vadd.f32 0.0, %v200
    %v202 = vpop.f32.mrb[0].mxu0
    %v203 = vadd.f32 0.0, %v202
    %204 = vmatprep.mubr.f32.mxu0 0.0
    %205 = vmatmul.mubr.f32.gmra.mrb[0].mxu0 %v46
    %v206 = vpop.f32.mrb[0].mxu0
    %v207 = vadd.f32 0.0, %v206
    %v208 = vpop.f32.mrb[0].mxu0
    %v209 = vadd.f32 0.0, %v208
    %210 = vmatprep.mubr.f32.mxu0 0.0
    %211 = vmatmul.mubr.f32.gmra.mrb[0].mxu0 %v47
    %v212 = vpop.f32.mrb[0].mxu0
    %v213 = vadd.f32 0.0, %v212
    %v214 = vpop.f32.mrb[0].mxu0
    %v215 = vadd.f32 0.0, %v214
    %216 = vmatprep.mubr.f32.mxu0 0.0
    %217 = vmatmul.mubr.f32.gmra.mrb[0].mxu0 %v48
    %v218 = vpop.f32.mrb[0].mxu0
    %v219 = vadd.f32 0.0, %v218
    %v220 = vpop.f32.mrb[0].mxu0
    %v221 = vadd.f32 0.0, %v220
    %222 = vmatprep.mubr.f32.mxu0 0.0
    %223 = vmatmul.mubr.f32.gmra.mrb[0].mxu0 %v49
    %v224 = vpop.f32.mrb[0].mxu0
    %v225 = vadd.f32 0.0, %v224
    %v226 = vpop.f32.mrb[0].mxu0
    %v227 = vadd.f32 0.0, %v226
    %228 = vmatprep.mubr.f32.mxu0 0.0
    %229 = vmatmul.mubr.f32.gmra.mrb[0].mxu0 %v50
    %v230 = vpop.f32.mrb[0].mxu0
    %v231 = vadd.f32 0.0, %v230
    %v232 = vpop.f32.mrb[0].mxu0
    %v233 = vadd.f32 0.0, %v232
    %234 = vmatprep.mubr.f32.mxu0 0.0
    %235 = vmatmul.mubr.f32.gmra.mrb[0].mxu0 %v51
    %v236 = vpop.f32.mrb[0].mxu0
    %v237 = vadd.f32 0.0, %v236
    %v238 = vpop.f32.mrb[0].mxu0
    %v239 = vadd.f32 0.0, %v238
    %240 = vmatprep.mubr.f32.mxu0 0.0
    %241 = vmatmul.mubr.f32.gmra.mrb[0].mxu0 %v52
    %v242 = vpop.f32.mrb[0].mxu0
    %v243 = vadd.f32 0.0, %v242
    %v244 = vpop.f32.mrb[0].mxu0
    %v245 = vadd.f32 0.0, %v244
    %246 = vmatprep.mubr.f32.mxu0 0.0
    %247 = vmatmul.mubr.f32.gmra.mrb[0].mxu0 %v53
    %v248 = vpop.f32.mrb[0].mxu0
    %v249 = vadd.f32 0.0, %v248
    %v250 = vpop.f32.mrb[0].mxu0
    %v251 = vadd.f32 0.0, %v250
    %252 = vmatprep.mubr.f32.mxu0 0.0
    %253 = vmatmul.mubr.f32.gmra.mrb[0].mxu0 %v54
    %v254 = vpop.f32.mrb[0].mxu0
    %v255 = vadd.f32 0.0, %v254
    %v256 = vpop.f32.mrb[0].mxu0
    %v257 = vadd.f32 0.0, %v256
    %258 = vmatprep.mubr.f32.mxu0 0.0
    %259 = vmatmul.mubr.f32.gmra.mrb[0].mxu0 %v55
    %v260 = vpop.f32.mrb[0].mxu0
    %v261 = vadd.f32 0.0, %v260
    %v262 = vpop.f32.mrb[0].mxu0
    %v263 = vadd.f32 0.0, %v262
    %264 = vmatprep.mubr.f32.mxu0 0.0
    %265 = vmatmul.mubr.f32.gmra.mrb[0].mxu0 %v56
    %v266 = vpop.f32.mrb[0].mxu0
    %v267 = vadd.f32 0.0, %v266
    %v268 = vpop.f32.mrb[0].mxu0
    %v269 = vadd.f32 0.0, %v268
    %270 = vmatprep.mubr.f32.mxu0 0.0
    %271 = vmatmul.mubr.f32.gmra.mrb[0].mxu0 %v57
    %v272 = vpop.f32.mrb[0].mxu0
    %v273 = vadd.f32 0.0, %v272
    %v274 = vpop.f32.mrb[0].mxu0
    %v275 = vadd.f32 0.0, %v274
    %276 = vmatprep.mubr.f32.mxu0 0.0
    %277 = vmatmul.mubr.f32.gmra.mrb[0].mxu0 %v58
    %v278 = vpop.f32.mrb[0].mxu0
    %v279 = vadd.f32 0.0, %v278
    %v280 = vpop.f32.mrb[0].mxu0
    %v281 = vadd.f32 0.0, %v280
    %282 = vmatprep.mubr.f32.mxu0 0.0
    %283 = vmatmul.mubr.f32.gmra.mrb[0].mxu0 %v59
    %v284 = vpop.f32.mrb[0].mxu0
    %v285 = vadd.f32 0.0, %v284
    %v286 = vpop.f32.mrb[0].mxu0
    %v287 = vadd.f32 0.0, %v286
    %288 = vmatprep.mubr.f32.mxu0 0.0
    %289 = vmatmul.mubr.f32.gmra.mrb[0].mxu0 %v60
    %v290 = vpop.f32.mrb[0].mxu0
    %v291 = vadd.f32 0.0, %v290
    %v292 = vpop.f32.mrb[0].mxu0
    %v293 = vadd.f32 0.0, %v292
    %294 = vmatprep.mubr.f32.mxu0 0.0
    %295 = vmatmul.mubr.f32.gmra.mrb[0].mxu0 %v61
    %v296 = vpop.f32.mrb[0].mxu0
    %v297 = vadd.f32 0.0, %v296
    %v298 = vpop.f32.mrb[0].mxu0
    %v299 = vadd.f32 0.0, %v298
    %300 = vmatprep.mubr.f32.mxu0 0.0
    %301 = vmatmul.mubr.f32.gmra.mrb[0].mxu0 %v62
    %v302 = vpop.f32.mrb[0].mxu0
    %v303 = vadd.f32 0.0, %v302
    %v304 = vpop.f32.mrb[0].mxu0
    %v305 = vadd.f32 0.0, %v304
    %306 = vmatprep.mubr.f32.mxu0 0.0
    %307 = vmatmul.mubr.f32.gmra.mrb[0].mxu0 %v63
    %v308 = vpop.f32.mrb[0].mxu0
    %v309 = vadd.f32 0.0, %v308
    %v310 = vpop.f32.mrb[0].mxu0
    %v311 = vadd.f32 0.0, %v310
    %312 = vmatprep.mubr.f32.mxu0 0.0
    %313 = vmatmul.mubr.f32.gmra.mrb[0].mxu0 %v64
    %v314 = vpop.f32.mrb[0].mxu0
    %v315 = vadd.f32 0.0, %v314
    %v316 = vpop.f32.mrb[0].mxu0
    %v317 = vadd.f32 0.0, %v316
    %318 = vmatprep.mubr.f32.mxu0 0.0
    %319 = vmatmul.mubr.f32.gmra.mrb[0].mxu0 %v65
    %v320 = vpop.f32.mrb[0].mxu0
    %v321 = vadd.f32 0.0, %v320
    %v322 = vpop.f32.mrb[0].mxu0
    %v323 = vadd.f32 0.0, %v322
    %324 = vmatprep.mubr.f32.mxu0 0.0
    %325 = vmatmul.mubr.f32.gmra.mrb[0].mxu0 %v66
    %v326 = vpop.f32.mrb[0].mxu0
    %v327 = vadd.f32 0.0, %v326
    %v328 = vpop.f32.mrb[0].mxu0
    %v329 = vadd.f32 0.0, %v328
    %330 = vmatprep.mubr.f32.mxu0 0.0
    %331 = vmatmul.mubr.f32.gmra.mrb[0].mxu0 %v67
    %v332 = vpop.f32.mrb[0].mxu0
    %v333 = vadd.f32 0.0, %v332
    %v334 = vpop.f32.mrb[0].mxu0
    %v335 = vadd.f32 0.0, %v334
    %336 = vmatprep.mubr.f32.mxu0 0.0
    %337 = vmatmul.mubr.f32.gmra.mrb[0].mxu0 %v68
    %v338 = vpop.f32.mrb[0].mxu0
    %v339 = vadd.f32 0.0, %v338
    %v340 = vpop.f32.mrb[0].mxu0
    %v341 = vadd.f32 0.0, %v340
    %342 = vmatprep.mubr.f32.mxu0 0.0
    %343 = vmatmul.mubr.f32.gmra.mrb[0].mxu0 %v69
    %v344 = vpop.f32.mrb[0].mxu0
    %v345 = vadd.f32 0.0, %v344
    %v346 = vpop.f32.mrb[0].mxu0
    %v347 = vadd.f32 0.0, %v346
    %348 = vmatprep.mubr.f32.mxu0 0.0
    %349 = vmatmul.mubr.f32.gmra.mrb[0].mxu0 %v70
    %v350 = vpop.f32.mrb[0].mxu0
    %v351 = vadd.f32 0.0, %v350
    %v352 = vpop.f32.mrb[0].mxu0
    %v353 = vadd.f32 0.0, %v352
    %354 = vmatprep.mubr.f32.mxu0 0.0
    %355 = vmatmul.mubr.f32.gmra.mrb[0].mxu0 %v71
    %v356 = vpop.f32.mrb[0].mxu0
    %v357 = vadd.f32 0.0, %v356
    %v358 = vpop.f32.mrb[0].mxu0
    %v359 = vadd.f32 0.0, %v358
    %360 = vdwg.mxu0
    %v361 = vtanh.pop %v171
    %v362 = vtanh.pop %v173
    %v363 = vtanh.pop %v177
    %v364 = vtanh.pop %v179
    %v365 = vtanh.pop %v183
    %v366 = vtanh.pop %v185
    %v367 = vtanh.pop %v189
    %v368 = vtanh.pop %v191
    %v369 = vtanh.pop %v195
    %v370 = vtanh.pop %v197
    %v371 = vtanh.pop %v201
    %v372 = vtanh.pop %v203
    %v373 = vtanh.pop %v207
    %v374 = vtanh.pop %v209
    %v375 = vtanh.pop %v213
    %v376 = vtanh.pop %v215
    %v377 = vtanh.pop %v219
    %v378 = vtanh.pop %v221
    %v379 = vtanh.pop %v225
    %v380 = vtanh.pop %v227
    %v381 = vtanh.pop %v231
    %v382 = vtanh.pop %v233
    %v383 = vtanh.pop %v237
    %v384 = vtanh.pop %v239
    %v385 = vtanh.pop %v243
    %v386 = vtanh.pop %v245
    %v387 = vtanh.pop %v249
    %v388 = vtanh.pop %v251
    %v389 = vtanh.pop %v255
    %v390 = vtanh.pop %v257
    %v391 = vtanh.pop %v261
    %v392 = vtanh.pop %v263
    %v393 = vtanh.pop %v267
    %v394 = vtanh.pop %v269
    %v395 = vtanh.pop %v273
    %v396 = vtanh.pop %v275
    %v397 = vtanh.pop %v279
    %v398 = vtanh.pop %v281
    %v399 = vtanh.pop %v285
    %v400 = vtanh.pop %v287
    %v401 = vtanh.pop %v291
    %v402 = vtanh.pop %v293
    %v403 = vtanh.pop %v297
    %v404 = vtanh.pop %v299
    %v405 = vtanh.pop %v303
    %v406 = vtanh.pop %v305
    %v407 = vtanh.pop %v309
    %v408 = vtanh.pop %v311
    %v409 = vtanh.pop %v315
    %v410 = vtanh.pop %v317
    %v411 = vtanh.pop %v321
    %v412 = vtanh.pop %v323
    %v413 = vtanh.pop %v327
    %v414 = vtanh.pop %v329
    %v415 = vtanh.pop %v333
    %v416 = vtanh.pop %v335
    %v417 = vtanh.pop %v339
    %v418 = vtanh.pop %v341
    %v419 = vtanh.pop %v345
    %v420 = vtanh.pop %v347
    %v421 = vtanh.pop %v351
    %v422 = vtanh.pop %v353
    %v423 = vtanh.pop %v357
    %v424 = vtanh.pop %v359
    %v425 = vmax.f32 %v361, 0.0
    %v426 = vmax.f32 %v362, 0.0
    %v427 = vmax.f32 %v363, 0.0
    %v428 = vmax.f32 %v364, 0.0
    %v429 = vmax.f32 %v365, 0.0
    %v430 = vmax.f32 %v366, 0.0
    %v431 = vmax.f32 %v367, 0.0
    %v432 = vmax.f32 %v368, 0.0
    %v433 = vmax.f32 %v369, 0.0
    %v434 = vmax.f32 %v370, 0.0
    %v435 = vmax.f32 %v371, 0.0
    %v436 = vmax.f32 %v372, 0.0
    %v437 = vmax.f32 %v373, 0.0
    %v438 = vmax.f32 %v374, 0.0
    %v439 = vmax.f32 %v375, 0.0
    %v440 = vmax.f32 %v376, 0.0
    %v441 = vmax.f32 %v377, 0.0
    %v442 = vmax.f32 %v378, 0.0
    %v443 = vmax.f32 %v379, 0.0
    %v444 = vmax.f32 %v380, 0.0
    %v445 = vmax.f32 %v381, 0.0
    %v446 = vmax.f32 %v382, 0.0
    %v447 = vmax.f32 %v383, 0.0
    %v448 = vmax.f32 %v384, 0.0
    %v449 = vmax.f32 %v385, 0.0
    %v450 = vmax.f32 %v386, 0.0
    %v451 = vmax.f32 %v387, 0.0
    %v452 = vmax.f32 %v388, 0.0
    %v453 = vmax.f32 %v389, 0.0
    %v454 = vmax.f32 %v390, 0.0
    %v455 = vmax.f32 %v391, 0.0
    %v456 = vmax.f32 %v392, 0.0
    %v457 = vmax.f32 %v393, 0.0
    %v458 = vmax.f32 %v394, 0.0
    %v459 = vmax.f32 %v395, 0.0
    %v460 = vmax.f32 %v396, 0.0
    %v461 = vmax.f32 %v397, 0.0
    %v462 = vmax.f32 %v398, 0.0
    %v463 = vmax.f32 %v399, 0.0
    %v464 = vmax.f32 %v400, 0.0
    %v465 = vmax.f32 %v401, 0.0
    %v466 = vmax.f32 %v402, 0.0
    %v467 = vmax.f32 %v403, 0.0
    %v468 = vmax.f32 %v404, 0.0
    %v469 = vmax.f32 %v405, 0.0
    %v470 = vmax.f32 %v406, 0.0
    %v471 = vmax.f32 %v407, 0.0
    %v472 = vmax.f32 %v408, 0.0
    %v473 = vmax.f32 %v409, 0.0
    %v474 = vmax.f32 %v410, 0.0
    %v475 = vmax.f32 %v411, 0.0
    %v476 = vmax.f32 %v412, 0.0
    %v477 = vmax.f32 %v413, 0.0
    %v478 = vmax.f32 %v414, 0.0
    %v479 = vmax.f32 %v415, 0.0
    %v480 = vmax.f32 %v416, 0.0
    %v481 = vmax.f32 %v417, 0.0
    %v482 = vmax.f32 %v418, 0.0
    %v483 = vmax.f32 %v419, 0.0
    %v484 = vmax.f32 %v420, 0.0
    %v485 = vmax.f32 %v421, 0.0
    %v486 = vmax.f32 %v422, 0.0
    %v487 = vmax.f32 %v423, 0.0
    %v488 = vmax.f32 %v424, 0.0
    %489 = vst [vmem:[#allocation7] sm:$0xff] %v425
    %490 = vst [vmem:[#allocation7 + $0x8] sm:$0xff] %v426
    %491 = vst [vmem:[#allocation7 + $0x10] sm:$0xff] %v427
    %492 = vst [vmem:[#allocation7 + $0x18] sm:$0xff] %v428
    %493 = vst [vmem:[#allocation7 + $0x20] sm:$0xff] %v429
    %494 = vst [vmem:[#allocation7 + $0x28] sm:$0xff] %v430
    %495 = vst [vmem:[#allocation7 + $0x30] sm:$0xff] %v431
    %496 = vst [vmem:[#allocation7 + $0x38] sm:$0xff] %v432
    %497 = vst [vmem:[#allocation7 + $0x40] sm:$0xff] %v433
    %498 = vst [vmem:[#allocation7 + $0x48] sm:$0xff] %v434
    %499 = vst [vmem:[#allocation7 + $0x50] sm:$0xff] %v435
    %500 = vst [vmem:[#allocation7 + $0x58] sm:$0xff] %v436
    %501 = vst [vmem:[#allocation7 + $0x60] sm:$0xff] %v437
    %502 = vst [vmem:[#allocation7 + $0x68] sm:$0xff] %v438
    %503 = vst [vmem:[#allocation7 + $0x70] sm:$0xff] %v439
    %504 = vst [vmem:[#allocation7 + $0x78] sm:$0xff] %v440
    %505 = vst [vmem:[#allocation7 + $0x80] sm:$0xff] %v441
    %506 = vst [vmem:[#allocation7 + $0x88] sm:$0xff] %v442
    %507 = vst [vmem:[#allocation7 + $0x90] sm:$0xff] %v443
    %508 = vst [vmem:[#allocation7 + $0x98] sm:$0xff] %v444
    %509 = vst [vmem:[#allocation7 + $0xa0] sm:$0xff] %v445
    %510 = vst [vmem:[#allocation7 + $0xa8] sm:$0xff] %v446
    %511 = vst [vmem:[#allocation7 + $0xb0] sm:$0xff] %v447
    %512 = vst [vmem:[#allocation7 + $0xb8] sm:$0xff] %v448
    %513 = vst [vmem:[#allocation7 + $0xc0] sm:$0xff] %v449
    %514 = vst [vmem:[#allocation7 + $0xc8] sm:$0xff] %v450
    %515 = vst [vmem:[#allocation7 + $0xd0] sm:$0xff] %v451
    %516 = vst [vmem:[#allocation7 + $0xd8] sm:$0xff] %v452
    %517 = vst [vmem:[#allocation7 + $0xe0] sm:$0xff] %v453
    %518 = vst [vmem:[#allocation7 + $0xe8] sm:$0xff] %v454
    %519 = vst [vmem:[#allocation7 + $0xf0] sm:$0xff] %v455
    %520 = vst [vmem:[#allocation7 + $0xf8] sm:$0xff] %v456
    %521 = vst [vmem:[#allocation7 + $0x100] sm:$0xff] %v457
    %522 = vst [vmem:[#allocation7 + $0x108] sm:$0xff] %v458
    %523 = vst [vmem:[#allocation7 + $0x110] sm:$0xff] %v459
    %524 = vst [vmem:[#allocation7 + $0x118] sm:$0xff] %v460
    %525 = vst [vmem:[#allocation7 + $0x120] sm:$0xff] %v461
    %526 = vst [vmem:[#allocation7 + $0x128] sm:$0xff] %v462
    %527 = vst [vmem:[#allocation7 + $0x130] sm:$0xff] %v463
    %528 = vst [vmem:[#allocation7 + $0x138] sm:$0xff] %v464
    %529 = vst [vmem:[#allocation7 + $0x140] sm:$0xff] %v465
    %530 = vst [vmem:[#allocation7 + $0x148] sm:$0xff] %v466
    %531 = vst [vmem:[#allocation7 + $0x150] sm:$0xff] %v467
    %532 = vst [vmem:[#allocation7 + $0x158] sm:$0xff] %v468
    %533 = vst [vmem:[#allocation7 + $0x160] sm:$0xff] %v469
    %534 = vst [vmem:[#allocation7 + $0x168] sm:$0xff] %v470
    %535 = vst [vmem:[#allocation7 + $0x170] sm:$0xff] %v471
    %536 = vst [vmem:[#allocation7 + $0x178] sm:$0xff] %v472
    %537 = vst [vmem:[#allocation7 + $0x180] sm:$0xff] %v473
    %538 = vst [vmem:[#allocation7 + $0x188] sm:$0xff] %v474
    %539 = vst [vmem:[#allocation7 + $0x190] sm:$0xff] %v475
    %540 = vst [vmem:[#allocation7 + $0x198] sm:$0xff] %v476
    %541 = vst [vmem:[#allocation7 + $0x1a0] sm:$0xff] %v477
    %542 = vst [vmem:[#allocation7 + $0x1a8] sm:$0xff] %v478
    %543 = vst [vmem:[#allocation7 + $0x1b0] sm:$0xff] %v479
    %544 = vst [vmem:[#allocation7 + $0x1b8] sm:$0xff] %v480
    %545 = vst [vmem:[#allocation7 + $0x1c0] sm:$0xff] %v481
    %546 = vst [vmem:[#allocation7 + $0x1c8] sm:$0xff] %v482
    %547 = vst [vmem:[#allocation7 + $0x1d0] sm:$0xff] %v483
    %548 = vst [vmem:[#allocation7 + $0x1d8] sm:$0xff] %v484
    %549 = vst [vmem:[#allocation7 + $0x1e0] sm:$0xff] %v485
    %550 = vst [vmem:[#allocation7 + $0x1e8] sm:$0xff] %v486
    %551 = vst [vmem:[#allocation7 + $0x1f0] sm:$0xff] %v487
    %552 = vst [vmem:[#allocation7 + $0x1f8] sm:$0xff] %v488
    // Predicated region
    $region18: #{tpu_custom_call.1} parent=1 // pred_check
      _
    $region19: #{tpu_custom_call.1} parent=1 // pred_check_branch
      %554 = sbr.rel (0) target = $region21
    $region20: #{tpu_custom_call.1} parent=1 // pred_region
      %s556 = ssub.s32 8192, 8192
      %557 = vsyncadd [#allocation4], %s556
      %s558 = sshll.u32 [#allocation7], 4
      %s559 = int_to_ptr.vmem [resolvable:$true] %s558
      %564 = dma.vmem_to_hbm [thread:$0]  %s559, 8192, %s2, [#allocation4], 256, 256, 16
    $region21: #{tpu_custom_call.1} parent=1 // pred_fallthru
      _
    // Predicated region
    $region22: #{tpu_custom_call.1} parent=1 // pred_check
      _
    $region23: #{tpu_custom_call.1} parent=1 // pred_check_branch
      %566 = sbr.rel (0) target = $region25
    $region24: #{tpu_custom_call.1} parent=1 // pred_region
      %567 = dma.done [#allocation4], 8192
    $region25: #{tpu_custom_call.1} parent=1 // pred_fallthru
      _
    %568 = vsyncpa [#allocation3], 1
    %569 = vsyncpa [#allocation6], 1
    %570 = vsyncpa [#allocation4], 1

</llo_original>
